<compile_context>
chip_gen: v6e
topology: v6e:2x2x1
jax: 0.10.0
libtpu: 0.0.40
codegen_flags: <defaults>
</compile_context>

<pallas_src>
import math

import jax
import jax.numpy as jnp
from jax.experimental import pallas as pl
from jax.experimental.pallas import tpu as pltpu


# ------------------------------------------------------------------
# Tiling helpers
# ------------------------------------------------------------------
def _round_up(x: int, m: int) -> int:
    return ((x + m - 1) // m) * m


def _pick_spatial_tile(hw: int, cap: int = 2048) -> int:
    """Spatial (lane) tile for the fused head kernel.

    * hw <= 512: one block, full extent (always a legal block shape).
    * hw  > 512: a 128-multiple tile, capped at `cap` lanes, sized so there are
      at least two spatial grid steps (pipelining + megacore even at batch=1).
      The partial last block is masked by Pallas (block_shape constraint is on
      the block, not the array).
    """
    if hw <= 512:
        return hw
    half = _round_up((hw + 1) // 2, 128)   # >= 2 spatial steps
    return min(cap, half)


# ------------------------------------------------------------------
# Fused prediction-head kernel (both 1x1 convs, channel-major matmuls)
# ------------------------------------------------------------------
def _pred_head_kernel(cls_x_ref, reg_x_ref, cls_w_ref, reg_w_ref,
                      cls_b_ref, reg_b_ref, cls_o_ref, reg_o_ref):
    # cls_x_ref: (Cin_cls, t)          reg_x_ref: (Cin_reg, t)
    # cls_w_ref: (num_classes, Cin)    reg_w_ref: (num_coords, Cin)
    # cls_b_ref: (num_classes, 1) f32  reg_b_ref: (num_coords, 1) f32
    # cls_o_ref: (t, num_classes) f32  -- transposed store, final layout
    # reg_o_ref: (num_coords, t)  f32  -- lane-dense channel-major
    cls_out = jnp.dot(cls_w_ref[...], cls_x_ref[...],
                      preferred_element_type=jnp.float32) + cls_b_ref[...]
    reg_out = jnp.dot(reg_w_ref[...], reg_x_ref[...],
                      preferred_element_type=jnp.float32) + reg_b_ref[...]
    # Transpose the small (num_classes, t) result on-chip (XLU slot is free in
    # this memory-bound kernel) so the (B, HW, num_classes) output is written
    # directly, with no post-kernel HBM round trip.
    cls_o_ref[...] = cls_out.T.astype(cls_o_ref.dtype)
    reg_o_ref[...] = reg_out.astype(reg_o_ref.dtype)


def _pred_heads(cls_x, reg_x, cls_w, reg_w, cls_b, reg_b,
                num_classes, num_coords, tile_cap=2048):
    """cls_x/reg_x: (B, Cin, HW).

    Returns (pred_cls (B, HW, num_classes) f32, reg_out (B, num_coords, HW) f32).
    """
    B, c_cls, HW = cls_x.shape
    c_reg = reg_x.shape[1]
    t = _pick_spatial_tile(HW, tile_cap)
    n_t = pl.cdiv(HW, t)

    act_bytes = B * HW * (c_cls + c_reg) * jnp.dtype(cls_x.dtype).itemsize
    w_bytes = ((num_classes * c_cls + num_coords * c_reg)
               * jnp.dtype(cls_w.dtype).itemsize)
    out_bytes = B * HW * (num_classes + num_coords) * 4
    cost = pl.CostEstimate(
        flops=2 * B * HW * (num_classes * c_cls + num_coords * c_reg),
        transcendentals=0,
        bytes_accessed=act_bytes + w_bytes + out_bytes)

    return pl.pallas_call(
        _pred_head_kernel,
        out_shape=(
            jax.ShapeDtypeStruct((B, HW, num_classes), jnp.float32),
            jax.ShapeDtypeStruct((B, num_coords, HW), jnp.float32),
        ),
        grid_spec=pltpu.PrefetchScalarGridSpec(
            num_scalar_prefetch=0,
            grid=(B, n_t),
            in_specs=[
                # activations: the big NCHW data is read from HBM exactly once,
                # tiled over the spatial axis (partial last block masked).
                pl.BlockSpec((None, c_cls, t), lambda b, j: (b, 0, j)),
                pl.BlockSpec((None, c_reg, t), lambda b, j: (b, 0, j)),
                # weights / biases: constant index_map -> VMEM resident
                pl.BlockSpec((num_classes, c_cls), lambda b, j: (0, 0)),
                pl.BlockSpec((num_coords, c_reg), lambda b, j: (0, 0)),
                pl.BlockSpec((num_classes, 1), lambda b, j: (0, 0)),
                pl.BlockSpec((num_coords, 1), lambda b, j: (0, 0)),
            ],
            out_specs=(
                pl.BlockSpec((None, t, num_classes), lambda b, j: (b, j, 0)),
                pl.BlockSpec((None, num_coords, t), lambda b, j: (b, 0, j)),
            ),
        ),
        compiler_params=pltpu.CompilerParams(
            dimension_semantics=("parallel", "parallel")),
        cost_estimate=cost,
    )(cls_x, reg_x, cls_w, reg_w, cls_b, reg_b)


# ------------------------------------------------------------------
# Module-equivalent wrapper
# ------------------------------------------------------------------
class SingleLevelPredLayer:
    def __init__(self, cls_dim=256, reg_dim=256, stride=32, reg_max=16,
                 num_classes=80, num_coords=4, key=None,
                 compute_dtype=jnp.bfloat16, tile_cap=2048):
        self.stride = stride
        self.cls_dim = cls_dim
        self.reg_dim = reg_dim
        self.reg_max = reg_max
        self.num_classes = num_classes
        self.num_coords = num_coords
        self.compute_dtype = compute_dtype
        self.tile_cap = tile_cap

        if key is None:
            key = jax.random.PRNGKey(0)
        k1, k2 = jax.random.split(key)

        # Conv2d(Cin, Cout, k=1) weights stored channel-major as (Cout, Cin),
        # i.e. the conv weight with the trailing 1x1 squeezed out.
        bound_cls = 1.0 / math.sqrt(cls_dim)
        bound_reg = 1.0 / math.sqrt(reg_dim)
        self.cls_w = jax.random.uniform(
            k1, (num_classes, cls_dim), jnp.float32, -bound_cls, bound_cls)
        self.reg_w = jax.random.uniform(
            k2, (num_coords, reg_dim), jnp.float32, -bound_reg, bound_reg)

        # init_bias(): cls bias = prior log-odds, reg bias = 1.0
        cls_b_val = math.log(5.0 / num_classes / (640.0 / stride) ** 2)
        self.cls_b = jnp.full((num_classes,), cls_b_val, jnp.float32)
        self.reg_b = jnp.full((num_coords,), 1.0, jnp.float32)

    def generate_anchors(self, fmp_size):
        # Tiny elementwise work; plain JAX (XLA fuses it).
        fmp_h, fmp_w = fmp_size
        ay, ax = jnp.meshgrid(jnp.arange(fmp_h, dtype=jnp.float32),
                              jnp.arange(fmp_w, dtype=jnp.float32),
                              indexing="ij")
        anchors = jnp.stack([ax, ay], axis=-1).reshape(-1, 2)
        return (anchors + 0.5) * jnp.float32(self.stride)

    def __call__(self, cls_feat, reg_feat):
        # cls_feat / reg_feat: NCHW (B, Cin, H, W), matching the PyTorch module.
        B, _, H, W = cls_feat.shape
        HW = H * W
        cdt = self.compute_dtype

        # Free, contiguous reshape NCHW -> (B, Cin, H*W); the large activations
        # are never transposed and (in bf16) read from HBM exactly once.
        cls_x = cls_feat.reshape(B, self.cls_dim, HW).astype(cdt)
        reg_x = reg_feat.reshape(B, self.reg_dim, HW).astype(cdt)

        pred_cls, reg_o = _pred_heads(
            cls_x, reg_x,
            self.cls_w.astype(cdt), self.reg_w.astype(cdt),
            self.cls_b.reshape(-1, 1), self.reg_b.reshape(-1, 1),
            self.num_classes, self.num_coords, self.tile_cap)

        # pred_cls already (B, HW, num_classes) from the in-kernel transpose.
        # reg head is only num_coords=4 channels: this XLA transpose moves a
        # negligible amount of data.  The reshape to (B, -1, 4*reg_max) folds
        # 16 spatial positions per row exactly like the PyTorch reference
        # (permute + view with a 4-channel conv output).
        pred_reg = jnp.transpose(reg_o, (0, 2, 1)).reshape(
            B, -1, 4 * self.reg_max)

        anchors = self.generate_anchors([H, W])                       # (HW, 2)
        stride_tensor = jnp.full((HW, 1), float(self.stride), jnp.float32)

        return {
            "pred_cls": pred_cls,
            "pred_reg": pred_reg,
            "anchors": anchors,
            "strides": self.stride,
            "stride_tensor": stride_tensor,
        }


# ------------------------------------------------------------------
# Demo / self-check
# ------------------------------------------------------------------
def _check_config(B, C, H, W, key):
    k1, k2, k3 = jax.random.split(key, 3)
    layer = SingleLevelPredLayer(cls_dim=C, reg_dim=C, stride=32, reg_max=16,
                                 num_classes=80, num_coords=4, key=k3)

    cls_feat = jax.random.normal(k1, (B, C, H, W), jnp.float32)   # NCHW
    reg_feat = jax.random.normal(k2, (B, C, H, W), jnp.float32)   # NCHW

    out = layer(cls_feat, reg_feat)
    jax.block_until_ready(out["pred_cls"])
    jax.block_until_ready(out["pred_reg"])
    jax.block_until_ready(out["anchors"])

    HW = H * W
    # Reference with the same bf16 input/weight rounding as the kernel
    # (kernel accumulates the bf16 products in f32).
    q = lambda a: a.astype(jnp.bfloat16).astype(jnp.float32)
    ref_cls = (jnp.einsum("bchw,kc->bhwk", q(cls_feat), q(layer.cls_w))
               + layer.cls_b).reshape(B, HW, 80)
    ref_reg = (jnp.einsum("bchw,kc->bhwk", q(reg_feat), q(layer.reg_w))
               + layer.reg_b).reshape(B, -1, 64)
    ay, ax = jnp.meshgrid(jnp.arange(H), jnp.arange(W), indexing="ij")
    ref_anchors = (jnp.stack([ax, ay], -1).reshape(-1, 2).astype(jnp.float32)
                   + 0.5) * 32.0

    assert out["pred_cls"].shape == (B, HW, 80)
    assert out["pred_reg"].shape == (B, HW * 4 // 64, 64)
    assert out["anchors"].shape == (HW, 2)
    assert out["stride_tensor"].shape == (HW, 1)
    assert jnp.allclose(out["pred_cls"], ref_cls, atol=2e-3, rtol=2e-3)
    assert jnp.allclose(out["pred_reg"], ref_reg, atol=2e-3, rtol=2e-3)
    assert jnp.allclose(out["anchors"], ref_anchors)
    assert jnp.allclose(out["stride_tensor"], 32.0)


if __name__ == "__main__":
    key = jax.random.PRNGKey(0)
    k1, k2 = jax.random.split(key)
    # Single spatial block (HW=256 <= 512).
    _check_config(B=2, C=32, H=16, W=16, key=k1)
    # HW=576 > 512 -> t=384, two spatial blocks, masked partial last block.
    _check_config(B=1, C=16, H=24, W=24, key=k2)
    print("KERNEL_OK")
</pallas_src>

<mosaic_0001>
module attributes {stable_mosaic.version = 11 : i64} {
  func.func @_pred_head_kernel(%arg0: i32, %arg1: i32, %arg2: memref<1x32x256xbf16, #tpu.memory_space<vmem>>, %arg3: memref<1x32x256xbf16, #tpu.memory_space<vmem>>, %arg4: memref<80x32xbf16, #tpu.memory_space<vmem>>, %arg5: memref<4x32xbf16, #tpu.memory_space<vmem>>, %arg6: memref<80x1xf32, #tpu.memory_space<vmem>>, %arg7: memref<4x1xf32, #tpu.memory_space<vmem>>, %arg8: memref<1x256x80xf32, #tpu.memory_space<vmem>>, %arg9: memref<1x4x256xf32, #tpu.memory_space<vmem>>) attributes {dimension_semantics = [#tpu.dimension_semantics<parallel>, #tpu.dimension_semantics<parallel>], iteration_bounds = array<i64: 2, 1>, scalar_prefetch = 0 : i64, scratch_operands = 0 : i64, tpu.core_type = #tpu.core_type<tc>, window_params = [{transform_indices = @transform_0, window_bounds = array<i64: 1, 32, 256>}, {transform_indices = @transform_1, window_bounds = array<i64: 1, 32, 256>}, {pipeline_mode = #tpu.pipeline_mode<synchronous>, transform_indices = @transform_2, window_bounds = array<i64: 80, 32>}, {pipeline_mode = #tpu.pipeline_mode<synchronous>, transform_indices = @transform_3, window_bounds = array<i64: 4, 32>}, {pipeline_mode = #tpu.pipeline_mode<synchronous>, transform_indices = @transform_4, window_bounds = array<i64: 80, 1>}, {pipeline_mode = #tpu.pipeline_mode<synchronous>, transform_indices = @transform_5, window_bounds = array<i64: 4, 1>}, {transform_indices = @transform_6, window_bounds = array<i64: 1, 256, 80>}, {transform_indices = @transform_7, window_bounds = array<i64: 1, 4, 256>}]} {
    %c0 = arith.constant 0 : index
    %c0_0 = arith.constant 0 : index
    %0 = vector.load %arg4[%c0, %c0_0] : memref<80x32xbf16, #tpu.memory_space<vmem>>, vector<80x32xbf16>
    %c0_1 = arith.constant 0 : index
    %c0_2 = arith.constant 0 : index
    %c0_3 = arith.constant 0 : index
    %1 = vector.load %arg2[%c0_1, %c0_2, %c0_3] : memref<1x32x256xbf16, #tpu.memory_space<vmem>>, vector<1x32x256xbf16>
    %2 = vector.shape_cast %1 : vector<1x32x256xbf16> to vector<32x256xbf16>
    %cst = arith.constant dense<0.000000e+00> : vector<80x256xf32>
    %3 = tpu.matmul %0, %2, %cst {dimension_numbers = #tpu.dot_dimension_numbers<[1], [0], [0], [1], [0, 0, 1, 1], [], []>} : vector<80x32xbf16>, vector<32x256xbf16>, vector<80x256xf32> -> vector<80x256xf32>
    %c0_4 = arith.constant 0 : index
    %c0_5 = arith.constant 0 : index
    %4 = vector.load %arg6[%c0_4, %c0_5] : memref<80x1xf32, #tpu.memory_space<vmem>>, vector<80x1xf32>
    %5 = vector.broadcast %4 : vector<80x1xf32> to vector<80x256xf32>
    %6 = arith.addf %3, %5 : vector<80x256xf32>
    %c0_6 = arith.constant 0 : index
    %c0_7 = arith.constant 0 : index
    %7 = vector.load %arg5[%c0_6, %c0_7] : memref<4x32xbf16, #tpu.memory_space<vmem>>, vector<4x32xbf16>
    %c0_8 = arith.constant 0 : index
    %c0_9 = arith.constant 0 : index
    %c0_10 = arith.constant 0 : index
    %8 = vector.load %arg3[%c0_8, %c0_9, %c0_10] : memref<1x32x256xbf16, #tpu.memory_space<vmem>>, vector<1x32x256xbf16>
    %9 = vector.shape_cast %8 : vector<1x32x256xbf16> to vector<32x256xbf16>
    %cst_11 = arith.constant dense<0.000000e+00> : vector<4x256xf32>
    %10 = tpu.matmul %7, %9, %cst_11 {dimension_numbers = #tpu.dot_dimension_numbers<[1], [0], [0], [1], [0, 0, 1, 1], [], []>} : vector<4x32xbf16>, vector<32x256xbf16>, vector<4x256xf32> -> vector<4x256xf32>
    %c0_12 = arith.constant 0 : index
    %c0_13 = arith.constant 0 : index
    %11 = vector.load %arg7[%c0_12, %c0_13] : memref<4x1xf32, #tpu.memory_space<vmem>>, vector<4x1xf32>
    %12 = vector.broadcast %11 : vector<4x1xf32> to vector<4x256xf32>
    %13 = arith.addf %10, %12 : vector<4x256xf32>
    %14 = tpu.transpose %6, [1, 0] : vector<80x256xf32> -> vector<256x80xf32>
    %c0_14 = arith.constant 0 : index
    %c0_15 = arith.constant 0 : index
    %c0_16 = arith.constant 0 : index
    %15 = vector.load %arg8[%c0_14, %c0_15, %c0_16] : memref<1x256x80xf32, #tpu.memory_space<vmem>>, vector<1x256x80xf32>
    %16 = vector.shape_cast %15 : vector<1x256x80xf32> to vector<256x80xf32>
    %17 = vector.shape_cast %14 : vector<256x80xf32> to vector<1x256x80xf32>
    tpu.vector_store %arg8[%c0_14, %c0_15, %c0_16], %17 {strides = array<i32>} : memref<1x256x80xf32, #tpu.memory_space<vmem>>, vector<1x256x80xf32>,
    %c0_17 = arith.constant 0 : index
    %c0_18 = arith.constant 0 : index
    %c0_19 = arith.constant 0 : index
    %18 = vector.load %arg9[%c0_17, %c0_18, %c0_19] : memref<1x4x256xf32, #tpu.memory_space<vmem>>, vector<1x4x256xf32>
    %19 = vector.shape_cast %18 : vector<1x4x256xf32> to vector<4x256xf32>
    %20 = vector.shape_cast %13 : vector<4x256xf32> to vector<1x4x256xf32>
    tpu.vector_store %arg9[%c0_17, %c0_18, %c0_19], %20 {strides = array<i32>} : memref<1x4x256xf32, #tpu.memory_space<vmem>>, vector<1x4x256xf32>,
    return
  }
  func.func @transform_0(%arg0: i32, %arg1: i32) -> (i32, i32, i32) {
    %c0_i32 = arith.constant 0 : i32
    %c0_i32_0 = arith.constant 0 : i32
    return %arg0, %c0_i32, %arg1 : i32, i32, i32
  }
  func.func @transform_1(%arg0: i32, %arg1: i32) -> (i32, i32, i32) {
    %c0_i32 = arith.constant 0 : i32
    %c0_i32_0 = arith.constant 0 : i32
    return %arg0, %c0_i32, %arg1 : i32, i32, i32
  }
  func.func @transform_2(%arg0: i32, %arg1: i32) -> (i32, i32) {
    %c0_i32 = arith.constant 0 : i32
    %c0_i32_0 = arith.constant 0 : i32
    %c0_i32_1 = arith.constant 0 : i32
    return %c0_i32, %c0_i32_0 : i32, i32
  }
  func.func @transform_3(%arg0: i32, %arg1: i32) -> (i32, i32) {
    %c0_i32 = arith.constant 0 : i32
    %c0_i32_0 = arith.constant 0 : i32
    %c0_i32_1 = arith.constant 0 : i32
    return %c0_i32, %c0_i32_0 : i32, i32
  }
  func.func @transform_4(%arg0: i32, %arg1: i32) -> (i32, i32) {
    %c0_i32 = arith.constant 0 : i32
    %c0_i32_0 = arith.constant 0 : i32
    %c0_i32_1 = arith.constant 0 : i32
    return %c0_i32, %c0_i32_0 : i32, i32
  }
  func.func @transform_5(%arg0: i32, %arg1: i32) -> (i32, i32) {
    %c0_i32 = arith.constant 0 : i32
    %c0_i32_0 = arith.constant 0 : i32
    %c0_i32_1 = arith.constant 0 : i32
    return %c0_i32, %c0_i32_0 : i32, i32
  }
  func.func @transform_6(%arg0: i32, %arg1: i32) -> (i32, i32, i32) {
    %c0_i32 = arith.constant 0 : i32
    %c0_i32_0 = arith.constant 0 : i32
    return %arg0, %arg1, %c0_i32 : i32, i32, i32
  }
  func.func @transform_7(%arg0: i32, %arg1: i32) -> (i32, i32, i32) {
    %c0_i32 = arith.constant 0 : i32
    %c0_i32_0 = arith.constant 0 : i32
    return %arg0, %c0_i32, %arg1 : i32, i32, i32
  }
}

</mosaic_0001>

<llo_original>
// kernel: tpu_custom_call.1
$region0: #{tpu_custom_call.1}
  #allocation0 [shape = 'u32[]', space=smem, size = 0x4, offset = 0x4, fixed_abs, tag = 'smem constant byte address 0x4 - core index']
  #allocation1 [shape = 'u32[144,128]{1,0:T(1,128)}', space=vmem, size = 0x12000, scoped, tag = 'internal scratch']
  %s0 = inlined_call_operand.vmem [shape: bf16[2,32,256], index: 0, kind: input, shape index: {}]
  %s1 = inlined_call_operand.vmem [shape: bf16[2,32,256], index: 1, kind: input, shape index: {}]
  %s2 = inlined_call_operand.vmem [shape: bf16[80,32], index: 2, kind: input, shape index: {}]
  %s3 = inlined_call_operand.vmem [shape: bf16[4,32], index: 3, kind: input, shape index: {}]
  %s4 = inlined_call_operand.vmem [shape: f32[80,1], index: 4, kind: input, shape index: {}]
  %s5 = inlined_call_operand.vmem [shape: f32[4,1], index: 5, kind: input, shape index: {}]
  %s6 = inlined_call_operand.vmem [shape: f32[2,256,80], index: 6, kind: output, shape index: {0}]
  %s7 = inlined_call_operand.hbm [shape: f32[2,4,256], index: 7, kind: output, shape index: {1}]
  %8 = xla_tuple %s6, %s7
  %s9 = sld [smem:[#allocation0]]
  $region65: #{tpu_custom_call.1} parent=0
    _
  %s11 = ssub.s32 1, %s9
  %s12 = scalar_select 0, %s11, %s9
  $region1: #{tpu_custom_call.1} parent=0
    #allocation2 [shape = 'u8[8192]{0}', space=vmem, size = 0x2000, scoped, tag = 'output window, operand 1']
    #allocation3 [shape = 's32[2]{0}', space=sflag, size = 0x8, scoped, tag = 'scoped memory for tpu_custom_call.1']
    %13 = vsyncpa [#allocation3], 0
    %s14 = scalar_lea.sflag [#allocation3], 1
    %15 = vsyncpa %s14, 0
    loop: start=0, step=1, limit=4
    $region2: #{tpu_custom_call.1} parent=1 // loop_pre_header
      _
    $region3: #{tpu_custom_call.1} parent=1 // loop_header
      %s17 = sphi 0, %s21
      %p18 = scmp.ge.s32.totalorder %s17, 4
      %s24 = sphi 0, %s36
      %s25 = sphi 0, %s32
      %s26 = sphi 0, %s24
      %s27 = sphi 0, %s25
      %s28 = sphi 0, %s26
      %s29 = sphi 0, %s27
      %s41 = sphi 0, %s43
      %s44 = sphi 0, %s41
      %s45 = sphi 0, %s44
      %s61 = sphi 0, %s45
      %s69 = sphi 0, %s71
      %s72 = sphi 0, %s69
      %s73 = sphi 0, %s72
      %s89 = sphi 0, %s73
      %s93 = sphi 0, %s93
      %s95 = sphi 0, %s93
      %s96 = sphi 0, %s95
      %s110 = sphi 0, %s96
      %s114 = sphi 0, %s114
      %s116 = sphi 0, %s114
      %s117 = sphi 0, %s116
      %s131 = sphi 0, %s117
      %s135 = sphi 0, %s135
      %s137 = sphi 0, %s135
      %s138 = sphi 0, %s137
      %s152 = sphi 0, %s138
      %s156 = sphi 0, %s156
      %s158 = sphi 0, %s156
      %s159 = sphi 0, %s158
      %s173 = sphi 0, %s159
      %s181 = sphi 0, %s183
      %s184 = sphi 0, %s181
      %s185 = sphi 0, %s184
      %s201 = sphi 0, %s185
      %s209 = sphi 0, %s211
      %s212 = sphi 0, %s209
      %s213 = sphi 0, %s212
      %s229 = sphi 0, %s213
    $region4: #{tpu_custom_call.1} parent=1 // loop_header_branch
      %20 = sbr.rel (%p18) target = $region8
    $region5: #{tpu_custom_call.1} parent=1 // loop_body
      %s22 = ssub.s32 %s17, 1
      %s23 = ssub.s32 %s17, 2
      %s30 = sadd.s32 1, %s25
      %p31 = scmp.ge.s32.totalorder %s30, 1
      %s32 = scalar_select %p31, 0, %s30
      %s33 = sadd.s32 1, %s24
      %s34 = scalar_select %p31, %s33, %s24
      %p35 = scmp.ge.s32.totalorder %s34, 2
      %s36 = scalar_select %p35, 0, %s34
      %s37 = ssub.s32 %s24, %s36
      %s38 = ssub.s32 %s25, %s32
      %s39 = sor.u32 %s37, %s38
      %p40 = scmp.eq.s32.totalorder %s39, 0
      %s42 = sadd.s32 %s41, 1
      %s43 = scalar_select %p40, %s41, %s42
      %p46 = pneg %p40
      %p47 = scmp.eq.s32.totalorder %s17, 1
      %p48 = por %p46, %p47
      %p49 = scmp.ne.s32.totalorder %s41, %s44
      %p50 = scmp.eq.s32.totalorder %s17, 0
      %p51 = por %p49, %p50
      %p52 = scmp.ne.s32.totalorder %s41, %s44
      %p53 = scmp.eq.s32.totalorder %s22, 1
      %p54 = por %p52, %p53
      %p55 = scmp.ne.s32.totalorder %s44, %s45
      %p56 = scmp.eq.s32.totalorder %s22, 0
      %p57 = por %p55, %p56
      %p58 = scmp.ne.s32.totalorder %s44, %s45
      %p59 = scmp.eq.s32.totalorder %s23, 1
      %p60 = por %p58, %p59
      %p62 = scmp.ne.s32.totalorder %s45, %s61
      %p63 = scmp.eq.s32.totalorder %s23, 0
      %p64 = por %p62, %p63
      %s65 = ssub.s32 %s24, %s36
      %s66 = ssub.s32 %s25, %s32
      %s67 = sor.u32 %s65, %s66
      %p68 = scmp.eq.s32.totalorder %s67, 0
      %s70 = sadd.s32 %s69, 1
      %s71 = scalar_select %p68, %s69, %s70
      %p74 = pneg %p68
      %p75 = scmp.eq.s32.totalorder %s17, 1
      %p76 = por %p74, %p75
      %p77 = scmp.ne.s32.totalorder %s69, %s72
      %p78 = scmp.eq.s32.totalorder %s17, 0
      %p79 = por %p77, %p78
      %p80 = scmp.ne.s32.totalorder %s69, %s72
      %p81 = scmp.eq.s32.totalorder %s22, 1
      %p82 = por %p80, %p81
      %p83 = scmp.ne.s32.totalorder %s72, %s73
      %p84 = scmp.eq.s32.totalorder %s22, 0
      %p85 = por %p83, %p84
      %p86 = scmp.ne.s32.totalorder %s72, %s73
      %p87 = scmp.eq.s32.totalorder %s23, 1
      %p88 = por %p86, %p87
      %p90 = scmp.ne.s32.totalorder %s73, %s89
      %p91 = scmp.eq.s32.totalorder %s23, 0
      %p92 = por %p90, %p91
      %s94 = sadd.s32 %s93, 1
      %p97 = scmp.eq.s32.totalorder %s17, 1
      %p98 = scmp.ne.s32.totalorder %s93, %s95
      %p99 = scmp.eq.s32.totalorder %s17, 0
      %p100 = por %p98, %p99
      %p101 = scmp.ne.s32.totalorder %s93, %s95
      %p102 = scmp.eq.s32.totalorder %s22, 1
      %p103 = por %p101, %p102
      %p104 = scmp.ne.s32.totalorder %s95, %s96
      %p105 = scmp.eq.s32.totalorder %s22, 0
      %p106 = por %p104, %p105
      %p107 = scmp.ne.s32.totalorder %s95, %s96
      %p108 = scmp.eq.s32.totalorder %s23, 1
      %p109 = por %p107, %p108
      %p111 = scmp.ne.s32.totalorder %s96, %s110
      %p112 = scmp.eq.s32.totalorder %s23, 0
      %p113 = por %p111, %p112
      %s115 = sadd.s32 %s114, 1
      %p118 = scmp.eq.s32.totalorder %s17, 1
      %p119 = scmp.ne.s32.totalorder %s114, %s116
      %p120 = scmp.eq.s32.totalorder %s17, 0
      %p121 = por %p119, %p120
      %p122 = scmp.ne.s32.totalorder %s114, %s116
      %p123 = scmp.eq.s32.totalorder %s22, 1
      %p124 = por %p122, %p123
      %p125 = scmp.ne.s32.totalorder %s116, %s117
      %p126 = scmp.eq.s32.totalorder %s22, 0
      %p127 = por %p125, %p126
      %p128 = scmp.ne.s32.totalorder %s116, %s117
      %p129 = scmp.eq.s32.totalorder %s23, 1
      %p130 = por %p128, %p129
      %p132 = scmp.ne.s32.totalorder %s117, %s131
      %p133 = scmp.eq.s32.totalorder %s23, 0
      %p134 = por %p132, %p133
      %s136 = sadd.s32 %s135, 1
      %p139 = scmp.eq.s32.totalorder %s17, 1
      %p140 = scmp.ne.s32.totalorder %s135, %s137
      %p141 = scmp.eq.s32.totalorder %s17, 0
      %p142 = por %p140, %p141
      %p143 = scmp.ne.s32.totalorder %s135, %s137
      %p144 = scmp.eq.s32.totalorder %s22, 1
      %p145 = por %p143, %p144
      %p146 = scmp.ne.s32.totalorder %s137, %s138
      %p147 = scmp.eq.s32.totalorder %s22, 0
      %p148 = por %p146, %p147
      %p149 = scmp.ne.s32.totalorder %s137, %s138
      %p150 = scmp.eq.s32.totalorder %s23, 1
      %p151 = por %p149, %p150
      %p153 = scmp.ne.s32.totalorder %s138, %s152
      %p154 = scmp.eq.s32.totalorder %s23, 0
      %p155 = por %p153, %p154
      %s157 = sadd.s32 %s156, 1
      %p160 = scmp.eq.s32.totalorder %s17, 1
      %p161 = scmp.ne.s32.totalorder %s156, %s158
      %p162 = scmp.eq.s32.totalorder %s17, 0
      %p163 = por %p161, %p162
      %p164 = scmp.ne.s32.totalorder %s156, %s158
      %p165 = scmp.eq.s32.totalorder %s22, 1
      %p166 = por %p164, %p165
      %p167 = scmp.ne.s32.totalorder %s158, %s159
      %p168 = scmp.eq.s32.totalorder %s22, 0
      %p169 = por %p167, %p168
      %p170 = scmp.ne.s32.totalorder %s158, %s159
      %p171 = scmp.eq.s32.totalorder %s23, 1
      %p172 = por %p170, %p171
      %p174 = scmp.ne.s32.totalorder %s159, %s173
      %p175 = scmp.eq.s32.totalorder %s23, 0
      %p176 = por %p174, %p175
      %s177 = ssub.s32 %s24, %s36
      %s178 = ssub.s32 %s25, %s32
      %s179 = sor.u32 %s177, %s178
      %p180 = scmp.eq.s32.totalorder %s179, 0
      %s182 = sadd.s32 %s181, 1
      %s183 = scalar_select %p180, %s181, %s182
      %p186 = pneg %p180
      %p187 = scmp.eq.s32.totalorder %s17, 1
      %p188 = por %p186, %p187
      %p189 = scmp.ne.s32.totalorder %s181, %s184
      %p190 = scmp.eq.s32.totalorder %s17, 0
      %p191 = por %p189, %p190
      %p192 = scmp.ne.s32.totalorder %s181, %s184
      %p193 = scmp.eq.s32.totalorder %s22, 1
      %p194 = por %p192, %p193
      %p195 = scmp.ne.s32.totalorder %s184, %s185
      %p196 = scmp.eq.s32.totalorder %s22, 0
      %p197 = por %p195, %p196
      %p198 = scmp.ne.s32.totalorder %s184, %s185
      %p199 = scmp.eq.s32.totalorder %s23, 1
      %p200 = por %p198, %p199
      %p202 = scmp.ne.s32.totalorder %s185, %s201
      %p203 = scmp.eq.s32.totalorder %s23, 0
      %p204 = por %p202, %p203
      %s205 = ssub.s32 %s24, %s36
      %s206 = ssub.s32 %s25, %s32
      %s207 = sor.u32 %s205, %s206
      %p208 = scmp.eq.s32.totalorder %s207, 0
      %s210 = sadd.s32 %s209, 1
      %s211 = scalar_select %p208, %s209, %s210
      %p214 = pneg %p208
      %p215 = scmp.eq.s32.totalorder %s17, 1
      %p216 = por %p214, %p215
      %p217 = scmp.ne.s32.totalorder %s209, %s212
      %p218 = scmp.eq.s32.totalorder %s17, 0
      %p219 = por %p217, %p218
      %p220 = scmp.ne.s32.totalorder %s209, %s212
      %p221 = scmp.eq.s32.totalorder %s22, 1
      %p222 = por %p220, %p221
      %p223 = scmp.ne.s32.totalorder %s212, %s213
      %p224 = scmp.eq.s32.totalorder %s22, 0
      %p225 = por %p223, %p224
      %p226 = scmp.ne.s32.totalorder %s212, %s213
      %p227 = scmp.eq.s32.totalorder %s23, 1
      %p228 = por %p226, %p227
      %p230 = scmp.ne.s32.totalorder %s213, %s229
      %p231 = scmp.eq.s32.totalorder %s23, 0
      %p232 = por %p230, %p231
      %p233 = scmp.le.s32.totalorder 1, %s17
      %p234 = scmp.lt.s32.totalorder %s17, 3
      %p235 = pnand %p233, %p234
      %p236 = pneg %p235
      // Predicated region
      $region9: #{tpu_custom_call.1} parent=5 // pred_check
        _
      $region10: #{tpu_custom_call.1} parent=5 // pred_check_branch
        %238 = sbr.rel (%p235) target = $region12
      $region11: #{tpu_custom_call.1} parent=5 // pred_region
        %s239 = ssub.s32 %s17, 1
        // Predicated region
        $region13: #{tpu_custom_call.1} parent=11 // pred_check
          %p240 = pneg %p106
        $region14: #{tpu_custom_call.1} parent=11 // pred_check_branch
          %242 = sbr.rel (%p240) target = $region16
        $region15: #{tpu_custom_call.1} parent=11 // pred_region
          _
        $region16: #{tpu_custom_call.1} parent=11 // pred_fallthru
          _
        // Predicated region
        $region17: #{tpu_custom_call.1} parent=11 // pred_check
          %p243 = pneg %p127
        $region18: #{tpu_custom_call.1} parent=11 // pred_check_branch
          %245 = sbr.rel (%p243) target = $region20
        $region19: #{tpu_custom_call.1} parent=11 // pred_region
          _
        $region20: #{tpu_custom_call.1} parent=11 // pred_fallthru
          _
        // Predicated region
        $region21: #{tpu_custom_call.1} parent=11 // pred_check
          %p246 = pneg %p148
        $region22: #{tpu_custom_call.1} parent=11 // pred_check_branch
          %248 = sbr.rel (%p246) target = $region24
        $region23: #{tpu_custom_call.1} parent=11 // pred_region
          _
        $region24: #{tpu_custom_call.1} parent=11 // pred_fallthru
          _
        // Predicated region
        $region25: #{tpu_custom_call.1} parent=11 // pred_check
          %p249 = pneg %p169
        $region26: #{tpu_custom_call.1} parent=11 // pred_check_branch
          %251 = sbr.rel (%p249) target = $region28
        $region27: #{tpu_custom_call.1} parent=11 // pred_region
          _
        $region28: #{tpu_custom_call.1} parent=11 // pred_fallthru
          _
      $region12: #{tpu_custom_call.1} parent=5 // pred_fallthru
        _
      %p252 = scmp.lt.s32.totalorder %s17, 2
      // Predicated region
      $region29: #{tpu_custom_call.1} parent=5 // pred_check
        %p253 = pneg %p252
      $region30: #{tpu_custom_call.1} parent=5 // pred_check_branch
        %255 = sbr.rel (%p253) target = $region32
      $region31: #{tpu_custom_call.1} parent=5 // pred_region
        // Predicated region
        $region33: #{tpu_custom_call.1} parent=31 // pred_check
          %p256 = pneg %p51
        $region34: #{tpu_custom_call.1} parent=31 // pred_check_branch
          %258 = sbr.rel (%p256) target = $region36
        $region35: #{tpu_custom_call.1} parent=31 // pred_region
          %s259 = smul.u32 2, %s25
          %p260 = scmp.lt.s32.totalorder %s24, 1
          %s261 = scalar_select %p260, %s24, 1
          %p262 = scmp.lt.s32.totalorder %s259, 1
          %s263 = scalar_select %p262, %s259, 1
          %s264 = smul.addr %s261, 8
          %s265 = sadd.s32 %s263, %s264
          %s266 = smul.addr %s265, 4
          %s267 = scalar_lea.vmem %s0, %s266
          %s268 = smul.u32 2, %s25
        $region36: #{tpu_custom_call.1} parent=31 // pred_fallthru
          _
        // Predicated region
        $region37: #{tpu_custom_call.1} parent=31 // pred_check
          %p269 = pneg %p79
        $region38: #{tpu_custom_call.1} parent=31 // pred_check_branch
          %271 = sbr.rel (%p269) target = $region40
        $region39: #{tpu_custom_call.1} parent=31 // pred_region
          %s272 = smul.u32 2, %s25
          %p273 = scmp.lt.s32.totalorder %s24, 1
          %s274 = scalar_select %p273, %s24, 1
          %p275 = scmp.lt.s32.totalorder %s272, 1
          %s276 = scalar_select %p275, %s272, 1
          %s277 = smul.addr %s274, 8
          %s278 = sadd.s32 %s276, %s277
          %s279 = smul.addr %s278, 4
          %s280 = scalar_lea.vmem %s1, %s279
          %s281 = smul.u32 2, %s25
        $region40: #{tpu_custom_call.1} parent=31 // pred_fallthru
          _
      $region32: #{tpu_custom_call.1} parent=5 // pred_fallthru
        _
      %p282 = scmp.le.s32.totalorder 1, %s17
      %p283 = scmp.lt.s32.totalorder %s17, 3
      %p284 = pnand %p282, %p283
      %p285 = pneg %p284
      // Predicated region
      $region41: #{tpu_custom_call.1} parent=5 // pred_check
        _
      $region42: #{tpu_custom_call.1} parent=5 // pred_check_branch
        %287 = sbr.rel (%p284) target = $region44
      $region43: #{tpu_custom_call.1} parent=5 // pred_region
        %s288 = ssub.s32 %s17, 1
        %s289 = smul.u32 2, %s27
        %p290 = scmp.lt.s32.totalorder %s26, 1
        %s291 = scalar_select %p290, %s26, 1
        %p292 = scmp.lt.s32.totalorder %s289, 1
        %s293 = scalar_select %p292, %s289, 1
        %s294 = smul.addr %s291, 8
        %s295 = sadd.s32 %s293, %s294
        %s296 = smul.addr %s295, 4
        %s297 = scalar_lea.vmem %s0, %s296
        %p298 = pneg %p57
        %p299 = pneg %p54
        %s300 = smul.u32 2, %s27
        %p301 = scmp.lt.s32.totalorder %s26, 1
        %s302 = scalar_select %p301, %s26, 1
        %p303 = scmp.lt.s32.totalorder %s300, 1
        %s304 = scalar_select %p303, %s300, 1
        %s305 = smul.addr %s302, 8
        %s306 = sadd.s32 %s304, %s305
        %s307 = smul.addr %s306, 4
        %s308 = scalar_lea.vmem %s1, %s307
        %p309 = pneg %p85
        %p310 = pneg %p82
        %p311 = pneg %p106
        %p312 = pneg %p103
        %p313 = pneg %p127
        %p314 = pneg %p124
        %p315 = pneg %p148
        %p316 = pneg %p145
        %p317 = pneg %p169
        %p318 = pneg %p166
        %p319 = pneg %p197
        %p320 = pneg %p194
        %s321 = smul.u32 32, %s27
        %p322 = scmp.lt.s32.totalorder %s26, 1
        %s323 = scalar_select %p322, %s26, 1
        %p324 = scmp.lt.s32.totalorder %s321, 31
        %s325 = scalar_select %p324, %s321, 31
        %s326 = smul.addr %s323, 32
        %s327 = sadd.s32 %s325, %s326
        %s328 = smul.addr %s327, 8
        %s329 = scalar_lea.vmem %s6, %s328
        %p330 = pneg %p225
        %p331 = pneg %p222
        %s332 = sand.u32 %s212, 1
        %s333 = scalar_lea.sflag [#allocation3], %s332
        %s334 = sand.u32 %s212, 1
        %s335 = smul.addr %s334, 8
        %s336 = scalar_lea.vmem [#allocation2], %s335
        %s337 = smul.u32 2, %s27
        %p338 = scmp.lt.s32.totalorder %s26, 1
        %s339 = scalar_select %p338, %s26, 1
        %p340 = scmp.lt.s32.totalorder %s337, 1
        %s341 = scalar_select %p340, %s337, 1
        %s342 = smul.addr %s339, 8
        %s343 = sadd.s32 %s341, %s342
        %s344 = smul.addr %s343, 4
        %s345 = scalar_lea.vmem %s0, %s344
        %s346 = smul.u32 2, %s27
        %s347 = smul.u32 2, %s27
        %p348 = scmp.lt.s32.totalorder %s26, 1
        %s349 = scalar_select %p348, %s26, 1
        %p350 = scmp.lt.s32.totalorder %s347, 1
        %s351 = scalar_select %p350, %s347, 1
        %s352 = smul.addr %s349, 8
        %s353 = sadd.s32 %s351, %s352
        %s354 = smul.addr %s353, 4
        %s355 = scalar_lea.vmem %s1, %s354
        %s356 = smul.u32 2, %s27
        %s357 = smul.u32 32, %s27
        %p358 = scmp.lt.s32.totalorder %s26, 1
        %s359 = scalar_select %p358, %s26, 1
        %p360 = scmp.lt.s32.totalorder %s357, 31
        %s361 = scalar_select %p360, %s357, 31
        %s362 = smul.addr %s359, 32
        %s363 = sadd.s32 %s361, %s362
        %s364 = smul.addr %s363, 8
        %s365 = scalar_lea.vmem %s6, %s364
        %s366 = smul.u32 32, %s27
        %s367 = smul.u32 2, %s27
        %v369 = vld [vmem:[%s2] sm:$0xf]
        %v370 = vld [vmem:[%s2 + $0x4] sm:$0xf]
        %v371 = vld [vmem:[%s2 + $0x8] sm:$0xf]
        %v372 = vld [vmem:[%s2 + $0xc] sm:$0xf]
        %v373 = vld [vmem:[%s2 + $0x10] sm:$0xf]
        %v374 = vld [vmem:[%s2 + $0x14] sm:$0xf]
        %v375 = vld [vmem:[%s2 + $0x18] sm:$0xf]
        %v376 = vld [vmem:[%s2 + $0x1c] sm:$0xf]
        %v377 = vld [vmem:[%s2 + $0x20] sm:$0xf]
        %v378 = vld [vmem:[%s2 + $0x24] sm:$0xf]
        %v379 = vld [vmem:[%s345] sm:$0xff]
        %v380 = vld [vmem:[%s345 + $0x8] sm:$0xff]
        %v381 = vld [vmem:[%s345 + $0x10] sm:$0xff]
        %v382 = vld [vmem:[%s345 + $0x18] sm:$0xff]
        %v383 = vld [vmem:[%s4] sm:$0xff]
        %v384 = vld [vmem:[%s4 + $0x8] sm:$0xff]
        %v385 = vld [vmem:[%s4 + $0x10] sm:$0xff]
        %v386 = vld [vmem:[%s4 + $0x18] sm:$0xff]
        %v387 = vld [vmem:[%s4 + $0x20] sm:$0xff]
        %v388 = vld [vmem:[%s4 + $0x28] sm:$0xff]
        %v389 = vld [vmem:[%s4 + $0x30] sm:$0xff]
        %v390 = vld [vmem:[%s4 + $0x38] sm:$0xff]
        %v391 = vld [vmem:[%s4 + $0x40] sm:$0xff]
        %v392 = vld [vmem:[%s4 + $0x48] sm:$0xff]
        %394 = vset.pattern.permute.xlu0 0
        %395 = vperm.xlu0 %394, %v383
        %v396 = vpop.permute.xlu0 %395
        %399 = vset.pattern.permute.xlu0 0
        %400 = vperm.xlu0 %399, %v384
        %v401 = vpop.permute.xlu0 %400
        %404 = vset.pattern.permute.xlu0 0
        %405 = vperm.xlu0 %404, %v385
        %v406 = vpop.permute.xlu0 %405
        %409 = vset.pattern.permute.xlu0 0
        %410 = vperm.xlu0 %409, %v386
        %v411 = vpop.permute.xlu0 %410
        %414 = vset.pattern.permute.xlu0 0
        %415 = vperm.xlu0 %414, %v387
        %v416 = vpop.permute.xlu0 %415
        %419 = vset.pattern.permute.xlu0 0
        %420 = vperm.xlu0 %419, %v388
        %v421 = vpop.permute.xlu0 %420
        %424 = vset.pattern.permute.xlu0 0
        %425 = vperm.xlu0 %424, %v389
        %v426 = vpop.permute.xlu0 %425
        %429 = vset.pattern.permute.xlu0 0
        %430 = vperm.xlu0 %429, %v390
        %v431 = vpop.permute.xlu0 %430
        %434 = vset.pattern.permute.xlu0 0
        %435 = vperm.xlu0 %434, %v391
        %v436 = vpop.permute.xlu0 %435
        %439 = vset.pattern.permute.xlu0 0
        %440 = vperm.xlu0 %439, %v392
        %v441 = vpop.permute.xlu0 %440
        %v453 = vunpack.c.l.b16 %v369
        %v454 = vunpack.c.l.b16 %v370
        %v455 = vunpack.c.l.b16 %v371
        %v456 = vunpack.c.l.b16 %v372
        %v457 = vunpack.c.l.b16 %v373
        %v458 = vunpack.c.l.b16 %v374
        %v459 = vunpack.c.l.b16 %v375
        %v460 = vunpack.c.l.b16 %v376
        %v461 = vunpack.c.l.b16 %v377
        %v462 = vunpack.c.l.b16 %v378
        %v463 = vpack.c.b16 %v454, %v453
        %v464 = vpack.c.b16 %v456, %v455
        %v465 = vpack.c.b16 %v458, %v457
        %v466 = vpack.c.b16 %v460, %v459
        %v467 = vpack.c.b16 %v462, %v461
        %v472 = vunpack.c.l.b16 %v379
        %v473 = vunpack.c.h.b16 %v379
        %v474 = vunpack.c.l.b16 %v380
        %v475 = vunpack.c.h.b16 %v380
        %v476 = vunpack.c.l.b16 %v381
        %v477 = vunpack.c.h.b16 %v381
        %v478 = vunpack.c.l.b16 %v382
        %v479 = vunpack.c.h.b16 %v382
        %v480 = vpack.c.b16 %v474, %v472
        %v481 = vpack.c.b16 %v475, %v473
        %v482 = vpack.c.b16 %v478, %v476
        %v483 = vpack.c.b16 %v479, %v477
        %vm488 = vcmask 261120
        %v490 = vsel %vm488, %v463, 0
        %v493 = vsel %vm488, %v464, 0
        %v496 = vsel %vm488, %v465, 0
        %v499 = vsel %vm488, %v466, 0
        %v502 = vsel %vm488, %v467, 0
        %504 = vmatprep.subr.bf16.mxu0 0
        %505 = vmatpush1.bf16.msra.mxu0 0
        %506 = vmatprep.subr.bf16.mxu0 0
        %507 = vmatpush1.bf16.msra.mxu0 0
        %508 = vmatprep.subr.bf16.mxu0 0
        %509 = vmatpush1.bf16.msra.mxu0 0
        %510 = vmatprep.subr.bf16.mxu0 0
        %511 = vmatpush1.bf16.msra.mxu0 0
        %512 = vmatprep.subr.bf16.mxu0 0
        %513 = vmatpush1.bf16.msra.mxu0 0
        %514 = vmatprep.subr.bf16.mxu0 0
        %515 = vmatpush1.bf16.msra.mxu0 0
        %516 = vmatprep.subr.bf16.mxu0 %v483
        %517 = vmatpush1.bf16.msra.mxu0 %v482
        %518 = vmatprep.subr.bf16.mxu0 %v481
        %519 = vmatpush1.bf16.msra.mxu0 %v480
        %520 = vmatprep.subr.bf16.mxu0 0
        %521 = vmatpush2.bf16.msra.mxu0 0
        %522 = vmatprep.subr.bf16.mxu0 0
        %523 = vmatpush2.bf16.msra.mxu0 0
        %524 = vmatprep.subr.bf16.mxu0 0
        %525 = vmatpush2.bf16.msra.mxu0 0
        %526 = vmatprep.subr.bf16.mxu0 0
        %527 = vmatpush2.bf16.msra.mxu0 0
        %528 = vmatprep.subr.bf16.mxu0 0
        %529 = vmatpush2.bf16.msra.mxu0 0
        %530 = vmatprep.subr.bf16.mxu0 0
        %531 = vmatpush2.bf16.msra.mxu0 0
        %532 = vmatprep.subr.bf16.mxu0 0
        %533 = vmatpush2.bf16.msra.mxu0 0
        %534 = vmatprep.subr.bf16.mxu0 0
        %535 = vmatpush2.bf16.msra.mxu0 0
        %536 = vmatprep.mubr.bf16.mxu0 0
        %537 = vmatmul.mubr.bf16.gmra.mxu0 %v490
        %v538 = vpop.f32.mrf.mxu0
        %v539 = vadd.f32 %v396, %v538
        %v540 = vpop.f32.mrf.mxu0
        %v541 = vadd.f32 %v396, %v540
        %v542 = vpop.f32.mrf.mxu0
        %v543 = vadd.f32 %v401, %v542
        %v544 = vpop.f32.mrf.mxu0
        %v545 = vadd.f32 %v401, %v544
        %546 = vmatprep.mubr.bf16.mxu0 0
        %547 = vmatmul.mubr.bf16.gmra.mxu0 %v493
        %v548 = vpop.f32.mrf.mxu0
        %v549 = vadd.f32 %v406, %v548
        %v550 = vpop.f32.mrf.mxu0
        %v551 = vadd.f32 %v406, %v550
        %v552 = vpop.f32.mrf.mxu0
        %v553 = vadd.f32 %v411, %v552
        %v554 = vpop.f32.mrf.mxu0
        %v555 = vadd.f32 %v411, %v554
        %556 = vmatprep.mubr.bf16.mxu0 0
        %557 = vmatmul.mubr.bf16.gmra.mxu0 %v496
        %v558 = vpop.f32.mrf.mxu0
        %v559 = vadd.f32 %v416, %v558
        %v560 = vpop.f32.mrf.mxu0
        %v561 = vadd.f32 %v416, %v560
        %v562 = vpop.f32.mrf.mxu0
        %v563 = vadd.f32 %v421, %v562
        %v564 = vpop.f32.mrf.mxu0
        %v565 = vadd.f32 %v421, %v564
        %566 = vmatprep.mubr.bf16.mxu0 0
        %567 = vmatmul.mubr.bf16.gmra.mxu0 %v499
        %v568 = vpop.f32.mrf.mxu0
        %v569 = vadd.f32 %v426, %v568
        %v570 = vpop.f32.mrf.mxu0
        %v571 = vadd.f32 %v426, %v570
        %v572 = vpop.f32.mrf.mxu0
        %v573 = vadd.f32 %v431, %v572
        %v574 = vpop.f32.mrf.mxu0
        %v575 = vadd.f32 %v431, %v574
        %576 = vmatprep.mubr.bf16.mxu0 0
        %577 = vmatmul.mubr.bf16.gmra.mxu0 %v502
        %v578 = vpop.f32.mrf.mxu0
        %v579 = vadd.f32 %v436, %v578
        %v580 = vpop.f32.mrf.mxu0
        %v581 = vadd.f32 %v436, %v580
        %v582 = vpop.f32.mrf.mxu0
        %v583 = vadd.f32 %v441, %v582
        %v584 = vpop.f32.mrf.mxu0
        %v585 = vadd.f32 %v441, %v584
        %586 = vdwg.mxu0
        %v587 = vld [vmem:[%s3] sm:$0x3]
        %v588 = vld [vmem:[%s355] sm:$0xff]
        %v589 = vld [vmem:[%s355 + $0x8] sm:$0xff]
        %v590 = vld [vmem:[%s355 + $0x10] sm:$0xff]
        %v591 = vld [vmem:[%s355 + $0x18] sm:$0xff]
        %v592 = vld [vmem:[%s5] sm:$0xf]
        %594 = vset.pattern.permute.xlu0 0
        %595 = vperm.xlu0 %594, %v592
        %v596 = vpop.permute.xlu0 %595
        %v602 = vunpack.c.l.b16 %v588
        %v603 = vunpack.c.h.b16 %v588
        %v604 = vunpack.c.l.b16 %v589
        %v605 = vunpack.c.h.b16 %v589
        %v606 = vunpack.c.l.b16 %v590
        %v607 = vunpack.c.h.b16 %v590
        %v608 = vunpack.c.l.b16 %v591
        %v609 = vunpack.c.h.b16 %v591
        %v610 = vpack.c.b16 %v604, %v602
        %v611 = vpack.c.b16 %v605, %v603
        %v612 = vpack.c.b16 %v608, %v606
        %v613 = vpack.c.b16 %v609, %v607
        %v619 = vsel %vm488, %v587, 0
        %621 = vmatprep.subr.bf16.mxu0 0
        %622 = vmatpush1.bf16.msra.mxu0 0
        %623 = vmatprep.subr.bf16.mxu0 0
        %624 = vmatpush1.bf16.msra.mxu0 0
        %625 = vmatprep.subr.bf16.mxu0 0
        %626 = vmatpush1.bf16.msra.mxu0 0
        %627 = vmatprep.subr.bf16.mxu0 0
        %628 = vmatpush1.bf16.msra.mxu0 0
        %629 = vmatprep.subr.bf16.mxu0 0
        %630 = vmatpush1.bf16.msra.mxu0 0
        %631 = vmatprep.subr.bf16.mxu0 0
        %632 = vmatpush1.bf16.msra.mxu0 0
        %633 = vmatprep.subr.bf16.mxu0 %v613
        %634 = vmatpush1.bf16.msra.mxu0 %v612
        %635 = vmatprep.subr.bf16.mxu0 %v611
        %636 = vmatpush1.bf16.msra.mxu0 %v610
        %637 = vmatprep.subr.bf16.mxu0 0
        %638 = vmatpush2.bf16.msra.mxu0 0
        %639 = vmatprep.subr.bf16.mxu0 0
        %640 = vmatpush2.bf16.msra.mxu0 0
        %641 = vmatprep.subr.bf16.mxu0 0
        %642 = vmatpush2.bf16.msra.mxu0 0
        %643 = vmatprep.subr.bf16.mxu0 0
        %644 = vmatpush2.bf16.msra.mxu0 0
        %645 = vmatprep.subr.bf16.mxu0 0
        %646 = vmatpush2.bf16.msra.mxu0 0
        %647 = vmatprep.subr.bf16.mxu0 0
        %648 = vmatpush2.bf16.msra.mxu0 0
        %649 = vmatprep.subr.bf16.mxu0 0
        %650 = vmatpush2.bf16.msra.mxu0 0
        %651 = vmatprep.subr.bf16.mxu0 0
        %652 = vmatpush2.bf16.msra.mxu0 0
        %653 = vmatprep.mubr.bf16.mxu0 0
        %654 = vmatmul.mubr.bf16.gmra.mxu0 %v619
        %v655 = vpop.f32.mrf.mxu0
        %v656 = vadd.f32 %v596, %v655
        %v657 = vpop.f32.mrf.mxu0
        %v658 = vadd.f32 %v596, %v657
        %v659 = vpop.f32.mrf.mxu0
        %v660 = vpop.f32.mrf.mxu0
        %661 = vdwg.mxu0
        %662 = vxpose.xlu0.b32.start [1/16] %v539, 128
        %663 = vxpose.xlu0.b32.cont [2/16] %v543, 128
        %664 = vxpose.xlu0.b32.cont [3/16] %v549, 128
        %665 = vxpose.xlu0.b32.cont [4/16] %v553, 128
        %666 = vxpose.xlu0.b32.cont [5/16] %v559, 128
        %667 = vxpose.xlu0.b32.cont [6/16] %v563, 128
        %668 = vxpose.xlu0.b32.cont [7/16] %v569, 128
        %669 = vxpose.xlu0.b32.cont [8/16] %v573, 128
        %670 = vxpose.xlu0.b32.cont [9/16] %v579, 128
        %671 = vxpose.xlu0.b32.cont [10/16] %v583, 128
        %672 = vxpose.xlu0.b32.cont [11/16] 0.0, 128
        %673 = vxpose.xlu0.b32.cont [12/16] 0.0, 128
        %674 = vxpose.xlu0.b32.cont [13/16] 0.0, 128
        %675 = vxpose.xlu0.b32.cont [14/16] 0.0, 128
        %676 = vxpose.xlu0.b32.cont [15/16] 0.0, 128
        %677 = vxpose.xlu0.b32.end [16/16] 0.0, 128
        %v678 = vpop.trf.xlu0
        %v679 = vpop.trf.xlu0
        %v680 = vpop.trf.xlu0
        %v681 = vpop.trf.xlu0
        %v682 = vpop.trf.xlu0
        %v683 = vpop.trf.xlu0
        %v684 = vpop.trf.xlu0
        %v685 = vpop.trf.xlu0
        %v686 = vpop.trf.xlu0
        %v687 = vpop.trf.xlu0
        %v688 = vpop.trf.xlu0
        %v689 = vpop.trf.xlu0
        %v690 = vpop.trf.xlu0
        %v691 = vpop.trf.xlu0
        %v692 = vpop.trf.xlu0
        %v693 = vpop.trf.xlu0
        %694 = vxpose.xlu0.b32.start [1/16] %v541, 128
        %695 = vxpose.xlu0.b32.cont [2/16] %v545, 128
        %696 = vxpose.xlu0.b32.cont [3/16] %v551, 128
        %697 = vxpose.xlu0.b32.cont [4/16] %v555, 128
        %698 = vxpose.xlu0.b32.cont [5/16] %v561, 128
        %699 = vxpose.xlu0.b32.cont [6/16] %v565, 128
        %700 = vxpose.xlu0.b32.cont [7/16] %v571, 128
        %701 = vxpose.xlu0.b32.cont [8/16] %v575, 128
        %702 = vxpose.xlu0.b32.cont [9/16] %v581, 128
        %703 = vxpose.xlu0.b32.cont [10/16] %v585, 128
        %704 = vxpose.xlu0.b32.cont [11/16] 0.0, 128
        %705 = vxpose.xlu0.b32.cont [12/16] 0.0, 128
        %706 = vxpose.xlu0.b32.cont [13/16] 0.0, 128
        %707 = vxpose.xlu0.b32.cont [14/16] 0.0, 128
        %708 = vxpose.xlu0.b32.cont [15/16] 0.0, 128
        %709 = vxpose.xlu0.b32.end [16/16] 0.0, 128
        %v710 = vpop.trf.xlu0
        %v711 = vpop.trf.xlu0
        %v712 = vpop.trf.xlu0
        %v713 = vpop.trf.xlu0
        %v714 = vpop.trf.xlu0
        %v715 = vpop.trf.xlu0
        %v716 = vpop.trf.xlu0
        %v717 = vpop.trf.xlu0
        %v718 = vpop.trf.xlu0
        %v719 = vpop.trf.xlu0
        %v720 = vpop.trf.xlu0
        %v721 = vpop.trf.xlu0
        %v722 = vpop.trf.xlu0
        %v723 = vpop.trf.xlu0
        %v724 = vpop.trf.xlu0
        %v725 = vpop.trf.xlu0
        %vm726 = vcmask 654336
        %727 = vst.msk [vmem:[%s365] sm:$0xff] %vm726, %v678
        %728 = vst.msk [vmem:[%s365 + $0x8] sm:$0xff] %vm726, %v679
        %729 = vst.msk [vmem:[%s365 + $0x10] sm:$0xff] %vm726, %v680
        %730 = vst.msk [vmem:[%s365 + $0x18] sm:$0xff] %vm726, %v681
        %731 = vst.msk [vmem:[%s365 + $0x20] sm:$0xff] %vm726, %v682
        %732 = vst.msk [vmem:[%s365 + $0x28] sm:$0xff] %vm726, %v683
        %733 = vst.msk [vmem:[%s365 + $0x30] sm:$0xff] %vm726, %v684
        %734 = vst.msk [vmem:[%s365 + $0x38] sm:$0xff] %vm726, %v685
        %735 = vst.msk [vmem:[%s365 + $0x40] sm:$0xff] %vm726, %v686
        %736 = vst.msk [vmem:[%s365 + $0x48] sm:$0xff] %vm726, %v687
        %737 = vst.msk [vmem:[%s365 + $0x50] sm:$0xff] %vm726, %v688
        %738 = vst.msk [vmem:[%s365 + $0x58] sm:$0xff] %vm726, %v689
        %739 = vst.msk [vmem:[%s365 + $0x60] sm:$0xff] %vm726, %v690
        %740 = vst.msk [vmem:[%s365 + $0x68] sm:$0xff] %vm726, %v691
        %741 = vst.msk [vmem:[%s365 + $0x70] sm:$0xff] %vm726, %v692
        %742 = vst.msk [vmem:[%s365 + $0x78] sm:$0xff] %vm726, %v693
        %743 = vst.msk [vmem:[%s365 + $0x80] sm:$0xff] %vm726, %v710
        %744 = vst.msk [vmem:[%s365 + $0x88] sm:$0xff] %vm726, %v711
        %745 = vst.msk [vmem:[%s365 + $0x90] sm:$0xff] %vm726, %v712
        %746 = vst.msk [vmem:[%s365 + $0x98] sm:$0xff] %vm726, %v713
        %747 = vst.msk [vmem:[%s365 + $0xa0] sm:$0xff] %vm726, %v714
        %748 = vst.msk [vmem:[%s365 + $0xa8] sm:$0xff] %vm726, %v715
        %749 = vst.msk [vmem:[%s365 + $0xb0] sm:$0xff] %vm726, %v716
        %750 = vst.msk [vmem:[%s365 + $0xb8] sm:$0xff] %vm726, %v717
        %751 = vst.msk [vmem:[%s365 + $0xc0] sm:$0xff] %vm726, %v718
        %752 = vst.msk [vmem:[%s365 + $0xc8] sm:$0xff] %vm726, %v719
        %753 = vst.msk [vmem:[%s365 + $0xd0] sm:$0xff] %vm726, %v720
        %754 = vst.msk [vmem:[%s365 + $0xd8] sm:$0xff] %vm726, %v721
        %755 = vst.msk [vmem:[%s365 + $0xe0] sm:$0xff] %vm726, %v722
        %756 = vst.msk [vmem:[%s365 + $0xe8] sm:$0xff] %vm726, %v723
        %757 = vst.msk [vmem:[%s365 + $0xf0] sm:$0xff] %vm726, %v724
        %758 = vst.msk [vmem:[%s365 + $0xf8] sm:$0xff] %vm726, %v725
        %v761 = vcombine.low %v656, %v658
        %763 = vst [vmem:[%s336] sm:$0xff] %v761
        %s764 = smul.u32 32, %s27
        %p765 = scmp.lt.s32.totalorder %s26, 1
        %s766 = scalar_select %p765, %s26, 1
        %p767 = scmp.lt.s32.totalorder %s764, 31
        %s768 = scalar_select %p767, %s764, 31
        %s769 = smul.addr %s766, 32
        %s770 = sadd.s32 %s768, %s769
        %s771 = smul.addr %s770, 8
        %s772 = scalar_lea.vmem %s6, %s771
        %s773 = sand.u32 %s212, 1
        %s774 = scalar_lea.sflag [#allocation3], %s773
        %s775 = sand.u32 %s212, 1
        %s776 = smul.addr %s775, 8
        %s777 = scalar_lea.vmem [#allocation2], %s776
        // Predicated region
        $region45: #{tpu_custom_call.1} parent=43 // pred_check
          %p778 = pneg %p194
        $region46: #{tpu_custom_call.1} parent=43 // pred_check_branch
          %780 = sbr.rel (%p778) target = $region48
        $region47: #{tpu_custom_call.1} parent=43 // pred_region
          %s781 = smul.u32 32, %s27
        $region48: #{tpu_custom_call.1} parent=43 // pred_fallthru
          _
        // Predicated region
        $region49: #{tpu_custom_call.1} parent=43 // pred_check
          %p782 = pneg %p222
        $region50: #{tpu_custom_call.1} parent=43 // pred_check_branch
          %784 = sbr.rel (%p782) target = $region52
        $region51: #{tpu_custom_call.1} parent=43 // pred_region
          %s785 = smul.u32 2, %s27
          %s787 = ssub.s32 128, 128
          %788 = vsyncadd %s774, %s787
          %s789 = smul.addr %s26, 2
          %s790 = sadd.s32 %s785, %s789
          %s791 = smul.addr %s790, 64
          %s792 = scalar_lea.hbm %s7, %s791
          %s794 = sshll.u32 %s777, 4
          %s795 = int_to_ptr.vmem [resolvable:$true] %s794
          %797 = dma.vmem_to_hbm [thread:$0]  %s795, 128, %s792, %s774
        $region52: #{tpu_custom_call.1} parent=43 // pred_fallthru
          _
      $region44: #{tpu_custom_call.1} parent=5 // pred_fallthru
        _
      %p798 = scmp.le.s32.totalorder 2, %s17
      // Predicated region
      $region53: #{tpu_custom_call.1} parent=5 // pred_check
        %p799 = pneg %p798
      $region54: #{tpu_custom_call.1} parent=5 // pred_check_branch
        %801 = sbr.rel (%p799) target = $region56
      $region55: #{tpu_custom_call.1} parent=5 // pred_region
        %s802 = ssub.s32 %s17, 2
        // Predicated region
        $region57: #{tpu_custom_call.1} parent=55 // pred_check
          %p803 = pneg %p200
        $region58: #{tpu_custom_call.1} parent=55 // pred_check_branch
          %805 = sbr.rel (%p803) target = $region60
        $region59: #{tpu_custom_call.1} parent=55 // pred_region
          %s806 = smul.u32 32, %s29
          %p807 = scmp.lt.s32.totalorder %s28, 1
          %s808 = scalar_select %p807, %s28, 1
          %p809 = scmp.lt.s32.totalorder %s806, 31
          %s810 = scalar_select %p809, %s806, 31
          %s811 = smul.addr %s808, 32
          %s812 = sadd.s32 %s810, %s811
          %s813 = smul.addr %s812, 8
          %s814 = scalar_lea.vmem %s6, %s813
        $region60: #{tpu_custom_call.1} parent=55 // pred_fallthru
          _
        // Predicated region
        $region61: #{tpu_custom_call.1} parent=55 // pred_check
          %p815 = pneg %p228
        $region62: #{tpu_custom_call.1} parent=55 // pred_check_branch
          %817 = sbr.rel (%p815) target = $region64
        $region63: #{tpu_custom_call.1} parent=55 // pred_region
          %s818 = sand.u32 %s213, 1
          %s819 = scalar_lea.sflag [#allocation3], %s818
          %s820 = sand.u32 %s213, 1
          %s821 = smul.addr %s820, 8
          %s822 = scalar_lea.vmem [#allocation2], %s821
          %823 = dma.done %s819, 128
        $region64: #{tpu_custom_call.1} parent=55 // pred_fallthru
          _
      $region56: #{tpu_custom_call.1} parent=5 // pred_fallthru
        _
    $region6: #{tpu_custom_call.1} parent=1 // loop_footer
      %s21 = sadd.s32 1, %s17
    $region7: #{tpu_custom_call.1} parent=1 // loop_footer_branch
      %16 = sbr.rel target = $region3
    $region8: #{tpu_custom_call.1} parent=1 // loop_exit
      _
    %824 = vsyncpa [#allocation3], 1
    %s825 = scalar_lea.sflag [#allocation3], 1
    %826 = vsyncpa %s825, 1

</llo_original>
